<compile_context>
chip_gen: v7x
topology: tpu7x:2x2x1
jax: 0.10.0
libtpu: 0.0.40
codegen_flags: <defaults>
</compile_context>

<pallas_src>
import math
from functools import partial

import jax
import jax.numpy as jnp
from jax.experimental import pallas as pl
from jax.experimental.pallas import tpu as pltpu


# ---------------------------------------------------------------------------
# Slab geometry helpers (lane/sublane-dense packing of the parameter pytree)
# ---------------------------------------------------------------------------
LANE = 1024            # last dim of the slab (multiple of 128 -> unmasked vld/vst)
MAX_TILE_ROWS = 256    # 256 x 1024 f32 tile = 1 MiB per operand buffer


def _round_up(x, m):
    return ((x + m - 1) // m) * m


def _cdiv(a, b):
    return -(-a // b)


def _slab_rows(total_elems):
    rows = max(8, _round_up(_cdiv(max(total_elems, 1), LANE), 8))
    if rows > MAX_TILE_ROWS:
        rows = _round_up(rows, MAX_TILE_ROWS)
    return rows


def _tile_rows(rows):
    return MAX_TILE_ROWS if rows % MAX_TILE_ROWS == 0 else rows


def _build_layout(params):
    """Group parameters by dtype; record flatten offsets for pack/unpack."""
    groups = {}
    for name, p in params.items():
        groups.setdefault(jnp.dtype(p.dtype), []).append((name, tuple(p.shape)))
    layout = {}
    for dt, entries in groups.items():
        names, shapes, sizes, offsets = [], [], [], []
        off = 0
        for name, shape in entries:
            size = int(math.prod(shape))
            names.append(name)
            shapes.append(shape)
            sizes.append(size)
            offsets.append(off)
            off += size
        layout[dt] = dict(
            names=names, shapes=shapes, sizes=sizes, offsets=offsets,
            total=off, rows=_slab_rows(off),
        )
    return layout


def _pack_slab(params, meta, dtype):
    flat = [jnp.ravel(params[n]).astype(dtype) for n in meta["names"]]
    cat = flat[0] if len(flat) == 1 else jnp.concatenate(flat)
    pad = meta["rows"] * LANE - meta["total"]
    return jnp.pad(cat, (0, pad)).reshape(meta["rows"], LANE)


def _unpack_slab(slab, meta):
    flat = slab.reshape(-1)
    out = {}
    for name, shape, size, off in zip(
            meta["names"], meta["shapes"], meta["sizes"], meta["offsets"]):
        out[name] = flat[off:off + size].reshape(shape)
    return out


# ---------------------------------------------------------------------------
# Kernel 1: fused EMA parameter update over a packed slab
#   out = frac * shadow + (1 - frac) * param      (== shadow - (1-frac)*(shadow-param))
# ---------------------------------------------------------------------------
def _ema_update_kernel(frac_ref, shadow_ref, param_ref, out_ref):
    frac = frac_ref[0]
    one_minus_frac = 1.0 - frac
    s = shadow_ref[...].astype(jnp.float32)   # single read of shadow
    p = param_ref[...].astype(jnp.float32)
    out_ref[...] = (frac * s + one_minus_frac * p).astype(out_ref.dtype)


@partial(jax.jit, donate_argnums=(0,))
def _ema_update_slab(shadow_slab, live_slab, frac):
    rows, lane = shadow_slab.shape
    tr = _tile_rows(rows)
    frac_arr = jnp.reshape(frac.astype(jnp.float32), (1,))
    return pl.pallas_call(
        _ema_update_kernel,
        out_shape=jax.ShapeDtypeStruct(shadow_slab.shape, shadow_slab.dtype),
        grid=(rows // tr,),
        in_specs=[
            pl.BlockSpec(memory_space=pltpu.SMEM),            # frac scalar in SMEM
            pl.BlockSpec((tr, lane), lambda i: (i, 0)),        # shadow tile
            pl.BlockSpec((tr, lane), lambda i: (i, 0)),        # live param tile
        ],
        out_specs=pl.BlockSpec((tr, lane), lambda i: (i, 0)),
        input_output_aliases={1: 0},                           # in-place shadow update
        compiler_params=pltpu.CompilerParams(
            dimension_semantics=("parallel",),                 # shard across TCs on v7x
            vmem_limit_bytes=32 * 1024 * 1024,
        ),
    )(frac_arr, shadow_slab, live_slab)


# ---------------------------------------------------------------------------
# Kernel 2: forward of the (synthetic) ema_model:  y = x @ W + b
#   MXU-tiled: grid (M/tm, N/tn, K/tk), f32 accumulator, bias on last K step.
# ---------------------------------------------------------------------------
def _linear_kernel(x_ref, w_ref, b_ref, o_ref, acc_ref):
    k = pl.program_id(2)

    @pl.when(k == 0)
    def _():
        acc_ref[...] = jnp.zeros_like(acc_ref)

    acc_ref[...] += jnp.dot(x_ref[...], w_ref[...],
                            preferred_element_type=jnp.float32)

    @pl.when(k == pl.num_programs(2) - 1)
    def _():
        o_ref[...] = (acc_ref[...] + b_ref[...].astype(jnp.float32)).astype(o_ref.dtype)


_MM_TM, _MM_TN, _MM_TK = 128, 128, 256


@jax.jit
def linear_forward(x, w, b):
    tm, tn, tk = _MM_TM, _MM_TN, _MM_TK
    B, D = x.shape
    _, H = w.shape
    Mp, Kp, Np = _round_up(B, tm), _round_up(D, tk), _round_up(H, tn)
    xp = jnp.pad(x, ((0, Mp - B), (0, Kp - D)))
    wp = jnp.pad(w, ((0, Kp - D), (0, Np - H)))
    bp = jnp.pad(b.reshape(1, -1), ((0, 0), (0, Np - H)))
    out = pl.pallas_call(
        _linear_kernel,
        out_shape=jax.ShapeDtypeStruct((Mp, Np), x.dtype),
        grid=(Mp // tm, Np // tn, Kp // tk),
        in_specs=[
            pl.BlockSpec((tm, tk), lambda i, j, k: (i, k)),
            pl.BlockSpec((tk, tn), lambda i, j, k: (k, j)),
            pl.BlockSpec((1, tn), lambda i, j, k: (0, j)),
        ],
        out_specs=pl.BlockSpec((tm, tn), lambda i, j, k: (i, j)),
        scratch_shapes=[pltpu.VMEM((tm, tn), jnp.float32)],
        compiler_params=pltpu.CompilerParams(
            dimension_semantics=("parallel", "parallel", "arbitrary")),
    )(xp, wp, bp)
    return out[:B, :H]


# ---------------------------------------------------------------------------
# Python-side glue mirroring the PyTorch module semantics.
# ---------------------------------------------------------------------------
class ExponentialMovingAverage:
    """EMA wrapper: shadow params are stored packed in per-dtype dense slabs so
    update() is a single gridded, aliased pallas_call per dtype (not per tensor)."""

    def __init__(self, params, buffers, decay=0.9999):
        self.params = dict(params)          # "live" model parameters
        self.buffers = dict(buffers)        # "live" model buffers
        self.decay_func = lambda x: decay * (1 - math.exp(-x / 2000))
        self.step_id = 0
        self.current_ema_frac = 0.0

        self._layout = _build_layout(self.params)
        # ema_model = deepcopy(model): shadow slabs initialized from live params
        self._ema_slabs = {
            dt: _pack_slab(self.params, meta, dt) for dt, meta in self._layout.items()
        }
        self.ema_buffers = {k: v for k, v in buffers.items()}
        self._ema_params_cache = None

    def ema_parameters(self):
        if self._ema_params_cache is None:
            merged = {}
            for dt, meta in self._layout.items():
                merged.update(_unpack_slab(self._ema_slabs[dt], meta))
            self._ema_params_cache = merged
        return self._ema_params_cache

    def update(self):
        self.step_id += 1
        frac = float(self.decay_func(self.step_id))
        self.current_ema_frac = frac

        all_names = set()
        for meta in self._layout.values():
            all_names.update(meta["names"])
        assert set(self.params.keys()) == all_names

        frac32 = jnp.float32(frac)
        for dt, meta in self._layout.items():
            live_slab = _pack_slab(self.params, meta, dt)
            self._ema_slabs[dt] = _ema_update_slab(self._ema_slabs[dt], live_slab, frac32)
        self._ema_params_cache = None

        assert self.buffers.keys() == self.ema_buffers.keys()
        for name, buffer in self.buffers.items():
            self.ema_buffers[name] = buffer           # buffers are copied verbatim

    def forward(self, x):
        # ema_model forward: y = x @ W + b  (Pallas MXU-tiled matmul)
        p = self.ema_parameters()
        return linear_forward(x, p["weight"], p["bias"])

    __call__ = forward


if __name__ == "__main__":
    key = jax.random.PRNGKey(0)
    k_w, k_b, k_x, k_g = jax.random.split(key, 4)

    B, D, H = 2, 32, 32
    # Deterministic synthetic model parameters (small linear model).
    weight = jax.random.normal(k_w, (D, H), dtype=jnp.float32) * 0.05
    bias = jax.random.normal(k_b, (H,), dtype=jnp.float32) * 0.05
    buffers = {"running_stat": jnp.zeros((H,), dtype=jnp.float32)}

    ema = ExponentialMovingAverage({"weight": weight, "bias": bias}, buffers, decay=0.9999)

    # Simulate one "training step": the live model drifts away from the EMA copy.
    grad_w = jax.random.normal(k_g, (D, H), dtype=jnp.float32) * 0.01
    ema.params["weight"] = ema.params["weight"] - grad_w
    ema.params["bias"] = ema.params["bias"] + 0.01
    ema.buffers["running_stat"] = ema.buffers["running_stat"] + 1.0

    # EMA update: one fused, gridded, in-place Pallas kernel over all params.
    ema.update()

    # Forward pass through the EMA model (Pallas matmul kernel).
    x = jax.random.normal(k_x, (B, D), dtype=jnp.float32)
    y = ema(x)
    y = jax.block_until_ready(y)

    # Pure-JAX reference for correctness.
    frac = ema.current_ema_frac
    ref_w = weight - (1.0 - frac) * (weight - ema.params["weight"])
    ref_b = bias - (1.0 - frac) * (bias - ema.params["bias"])
    ref_y = x @ ref_w + ref_b

    ema_p = ema.ema_parameters()
    assert jnp.allclose(ema_p["weight"], ref_w, atol=1e-6), "EMA weight mismatch"
    assert jnp.allclose(ema_p["bias"], ref_b, atol=1e-6), "EMA bias mismatch"
    assert jnp.allclose(ema.ema_buffers["running_stat"], ema.buffers["running_stat"]), \
        "buffer copy mismatch"
    assert jnp.allclose(y, ref_y, atol=1e-5), "forward mismatch"

    print("KERNEL_OK")
</pallas_src>

<mosaic_0001>
module attributes {stable_mosaic.version = 11 : i64} {
  func.func @_ema_update_kernel(%arg0: i32, %arg1: memref<1xf32, #tpu.memory_space<smem>>, %arg2: memref<8x1024xf32, #tpu.memory_space<vmem>>, %arg3: memref<8x1024xf32, #tpu.memory_space<vmem>>, %arg4: memref<8x1024xf32, #tpu.memory_space<vmem>>) attributes {dimension_semantics = [#tpu.dimension_semantics<parallel>], iteration_bounds = array<i64: 1>, scalar_prefetch = 0 : i64, scratch_operands = 0 : i64, tpu.core_type = #tpu.core_type<tc>, window_params = [{transform_indices = @transform_0, window_bounds = array<i64: 1>}, {transform_indices = @transform_1, window_bounds = array<i64: 8, 1024>}, {transform_indices = @transform_2, window_bounds = array<i64: 8, 1024>}, {transform_indices = @transform_3, window_bounds = array<i64: 8, 1024>}]} {
    %c0 = arith.constant 0 : index
    %0 = memref.load %arg1[%c0] : memref<1xf32, #tpu.memory_space<smem>>
    %cst = arith.constant 1.000000e+00 : f32
    %1 = arith.subf %cst, %0 : f32
    %c0_0 = arith.constant 0 : index
    %c0_1 = arith.constant 0 : index
    %2 = vector.load %arg2[%c0_0, %c0_1] : memref<8x1024xf32, #tpu.memory_space<vmem>>, vector<8x1024xf32>
    %c0_2 = arith.constant 0 : index
    %c0_3 = arith.constant 0 : index
    %3 = vector.load %arg3[%c0_2, %c0_3] : memref<8x1024xf32, #tpu.memory_space<vmem>>, vector<8x1024xf32>
    %4 = vector.broadcast %0 : f32 to vector<8x1024xf32>
    %5 = arith.mulf %4, %2 : vector<8x1024xf32>
    %6 = vector.broadcast %1 : f32 to vector<8x1024xf32>
    %7 = arith.mulf %6, %3 : vector<8x1024xf32>
    %8 = arith.addf %5, %7 : vector<8x1024xf32>
    %c0_4 = arith.constant 0 : index
    %c0_5 = arith.constant 0 : index
    %9 = vector.load %arg4[%c0_4, %c0_5] : memref<8x1024xf32, #tpu.memory_space<vmem>>, vector<8x1024xf32>
    tpu.vector_store %arg4[%c0_4, %c0_5], %8 {strides = array<i32>} : memref<8x1024xf32, #tpu.memory_space<vmem>>, vector<8x1024xf32>,
    return
  }
  func.func @transform_0(%arg0: i32) -> i32 {
    %c0_i32 = arith.constant 0 : i32
    %c0_i32_0 = arith.constant 0 : i32
    return %c0_i32 : i32
  }
  func.func @transform_1(%arg0: i32) -> (i32, i32) {
    %c0_i32 = arith.constant 0 : i32
    %c0_i32_0 = arith.constant 0 : i32
    return %arg0, %c0_i32 : i32, i32
  }
  func.func @transform_2(%arg0: i32) -> (i32, i32) {
    %c0_i32 = arith.constant 0 : i32
    %c0_i32_0 = arith.constant 0 : i32
    return %arg0, %c0_i32 : i32, i32
  }
  func.func @transform_3(%arg0: i32) -> (i32, i32) {
    %c0_i32 = arith.constant 0 : i32
    %c0_i32_0 = arith.constant 0 : i32
    return %arg0, %c0_i32 : i32, i32
  }
}

</mosaic_0001>

<llo_original>
// kernel: _ema_update_slab.1
$region0: #{_ema_update_slab.1}
  #allocation0 [shape = 'u32[]', space=smem, size = 0x4, offset = 0x4, fixed_abs, tag = 'smem constant byte address 0x4 - core index']
  #allocation1 [shape = 'u32[144,128]{1,0:T(1,128)}', space=vmem, size = 0x12000, scoped, tag = 'internal scratch']
  #allocation2 [shape = 'f32[1]{0:T(128)S(6)}', space=smem, size = 0x200, scoped, tag = 'scoped memory for _ema_update_slab.1']
  %s0 = inlined_call_operand.<no memory space> [shape: f32[1], index: 0, kind: input, shape index: {}]
  %s1 = inlined_call_operand.hbm [shape: f32[8,1024], index: 1, kind: input, shape index: {}, may-alias: {1,3}]
  %s2 = inlined_call_operand.hbm [shape: f32[8,1024], index: 2, kind: input, shape index: {}]
  %s3 = inlined_call_operand.hbm [shape: f32[8,1024], index: 3, kind: output, shape index: {}, may-alias: {1,3}]
  %s4 = sld [smem:[#allocation0]]
  $region30: #{_ema_update_slab.1} parent=0
    _
  %s6 = ssub.s32 1, %s4
  %s7 = scalar_select 0, %s6, %s4
  %8 = sst [smem:[#allocation2]] %s0
  $region1: #{_ema_update_slab.1} parent=0
    #allocation3 [shape = 'u8[32768]{0}', space=vmem, size = 0x8000, scoped, tag = 'input window, operand 1, single buffered']
    #allocation4 [shape = 's32[1]{0}', space=sflag, size = 0x4, scoped, tag = 'scoped memory for _ema_update_slab.1']
    #allocation5 [shape = 's32[1]{0}', space=sflag, size = 0x4, scoped, tag = 'scoped memory for _ema_update_slab.1']
    #allocation6 [shape = 'u8[32768]{0}', space=vmem, size = 0x8000, scoped, tag = 'input window, operand 2, single buffered']
    #allocation7 [shape = 's32[1]{0}', space=sflag, size = 0x4, scoped, tag = 'scoped memory for _ema_update_slab.1']
    #allocation8 [shape = 'u8[32768]{0}', space=vmem, size = 0x8000, scoped, tag = 'output window, operand 0, single buffered']
    %9 = vsyncpa [#allocation4], 0
    %10 = vsyncpa [#allocation7], 0
    %11 = vsyncpa [#allocation5], 0
    // Predicated region
    $region2: #{_ema_update_slab.1} parent=1 // pred_check
      _
    $region3: #{_ema_update_slab.1} parent=1 // pred_check_branch
      %13 = sbr.rel (0) target = $region5
    $region4: #{_ema_update_slab.1} parent=1 // pred_region
      _
    $region5: #{_ema_update_slab.1} parent=1 // pred_fallthru
      _
    // Predicated region
    $region6: #{_ema_update_slab.1} parent=1 // pred_check
      _
    $region7: #{_ema_update_slab.1} parent=1 // pred_check_branch
      %15 = sbr.rel (0) target = $region9
    $region8: #{_ema_update_slab.1} parent=1 // pred_region
      %s17 = ssub.s32 1024, 1024
      %18 = vsyncadd [#allocation4], %s17
      %s20 = sshll.u32 [#allocation3], 4
      %s21 = int_to_ptr.vmem [resolvable:$true] %s20
      %23 = dma.hbm_to_vmem [thread:$0]  %s1, 1024, %s21, [#allocation4]
    $region9: #{_ema_update_slab.1} parent=1 // pred_fallthru
      _
    // Predicated region
    $region10: #{_ema_update_slab.1} parent=1 // pred_check
      _
    $region11: #{_ema_update_slab.1} parent=1 // pred_check_branch
      %25 = sbr.rel (0) target = $region13
    $region12: #{_ema_update_slab.1} parent=1 // pred_region
      %s27 = ssub.s32 1024, 1024
      %28 = vsyncadd [#allocation7], %s27
      %s30 = sshll.u32 [#allocation6], 4
      %s31 = int_to_ptr.vmem [resolvable:$true] %s30
      %33 = dma.hbm_to_vmem [thread:$0]  %s2, 1024, %s31, [#allocation7]
    $region13: #{_ema_update_slab.1} parent=1 // pred_fallthru
      _
    // Predicated region
    $region14: #{_ema_update_slab.1} parent=1 // pred_check
      _
    $region15: #{_ema_update_slab.1} parent=1 // pred_check_branch
      %35 = sbr.rel (0) target = $region17
    $region16: #{_ema_update_slab.1} parent=1 // pred_region
      %36 = dma.done [#allocation4], 1024
    $region17: #{_ema_update_slab.1} parent=1 // pred_fallthru
      _
    // Predicated region
    $region18: #{_ema_update_slab.1} parent=1 // pred_check
      _
    $region19: #{_ema_update_slab.1} parent=1 // pred_check_branch
      %38 = sbr.rel (0) target = $region21
    $region20: #{_ema_update_slab.1} parent=1 // pred_region
      %39 = dma.done [#allocation7], 1024
    $region21: #{_ema_update_slab.1} parent=1 // pred_fallthru
      _
    %s40 = sld [smem:[#allocation2]]
    %s41 = ssub.f32 1.0, %s40
    %v42 = vld [vmem:[#allocation3] sm:$0xff]
    %v43 = vld [vmem:[#allocation3 + $0x8] sm:$0xff]
    %v44 = vld [vmem:[#allocation3 + $0x10] sm:$0xff]
    %v45 = vld [vmem:[#allocation3 + $0x18] sm:$0xff]
    %v46 = vld [vmem:[#allocation3 + $0x20] sm:$0xff]
    %v47 = vld [vmem:[#allocation3 + $0x28] sm:$0xff]
    %v48 = vld [vmem:[#allocation3 + $0x30] sm:$0xff]
    %v49 = vld [vmem:[#allocation3 + $0x38] sm:$0xff]
    %v50 = vld [vmem:[#allocation6] sm:$0xff]
    %v51 = vld [vmem:[#allocation6 + $0x8] sm:$0xff]
    %v52 = vld [vmem:[#allocation6 + $0x10] sm:$0xff]
    %v53 = vld [vmem:[#allocation6 + $0x18] sm:$0xff]
    %v54 = vld [vmem:[#allocation6 + $0x20] sm:$0xff]
    %v55 = vld [vmem:[#allocation6 + $0x28] sm:$0xff]
    %v56 = vld [vmem:[#allocation6 + $0x30] sm:$0xff]
    %v57 = vld [vmem:[#allocation6 + $0x38] sm:$0xff]
    %v58 = vstv %s40
    %v59 = vmul.f32 %v58, %v42
    %v60 = vmul.f32 %v58, %v43
    %v61 = vmul.f32 %v58, %v44
    %v62 = vmul.f32 %v58, %v45
    %v63 = vmul.f32 %v58, %v46
    %v64 = vmul.f32 %v58, %v47
    %v65 = vmul.f32 %v58, %v48
    %v66 = vmul.f32 %v58, %v49
    %v67 = vstv %s41
    %v68 = vmul.f32 %v67, %v50
    %v69 = vmul.f32 %v67, %v51
    %v70 = vmul.f32 %v67, %v52
    %v71 = vmul.f32 %v67, %v53
    %v72 = vmul.f32 %v67, %v54
    %v73 = vmul.f32 %v67, %v55
    %v74 = vmul.f32 %v67, %v56
    %v75 = vmul.f32 %v67, %v57
    %v76 = vadd.f32 %v59, %v68
    %v77 = vadd.f32 %v60, %v69
    %v78 = vadd.f32 %v61, %v70
    %v79 = vadd.f32 %v62, %v71
    %v80 = vadd.f32 %v63, %v72
    %v81 = vadd.f32 %v64, %v73
    %v82 = vadd.f32 %v65, %v74
    %v83 = vadd.f32 %v66, %v75
    %84 = vst [vmem:[#allocation8] sm:$0xff] %v76
    %85 = vst [vmem:[#allocation8 + $0x8] sm:$0xff] %v77
    %86 = vst [vmem:[#allocation8 + $0x10] sm:$0xff] %v78
    %87 = vst [vmem:[#allocation8 + $0x18] sm:$0xff] %v79
    %88 = vst [vmem:[#allocation8 + $0x20] sm:$0xff] %v80
    %89 = vst [vmem:[#allocation8 + $0x28] sm:$0xff] %v81
    %90 = vst [vmem:[#allocation8 + $0x30] sm:$0xff] %v82
    %91 = vst [vmem:[#allocation8 + $0x38] sm:$0xff] %v83
    // Predicated region
    $region22: #{_ema_update_slab.1} parent=1 // pred_check
      _
    $region23: #{_ema_update_slab.1} parent=1 // pred_check_branch
      %93 = sbr.rel (0) target = $region25
    $region24: #{_ema_update_slab.1} parent=1 // pred_region
      %s95 = ssub.s32 1024, 1024
      %96 = vsyncadd [#allocation5], %s95
      %s98 = sshll.u32 [#allocation8], 4
      %s99 = int_to_ptr.vmem [resolvable:$true] %s98
      %101 = dma.vmem_to_hbm [thread:$0]  %s99, 1024, %s3, [#allocation5]
    $region25: #{_ema_update_slab.1} parent=1 // pred_fallthru
      _
    // Predicated region
    $region26: #{_ema_update_slab.1} parent=1 // pred_check
      _
    $region27: #{_ema_update_slab.1} parent=1 // pred_check_branch
      %103 = sbr.rel (0) target = $region29
    $region28: #{_ema_update_slab.1} parent=1 // pred_region
      %104 = dma.done [#allocation5], 1024
    $region29: #{_ema_update_slab.1} parent=1 // pred_fallthru
      _
    %105 = vsyncpa [#allocation4], 1
    %106 = vsyncpa [#allocation7], 1
    %107 = vsyncpa [#allocation5], 1

</llo_original>
